<compile_context>
chip_gen: v5e
topology: v5e:2x2
jax: 0.10.0
libtpu: 0.0.40
codegen_flags: <defaults>
</compile_context>

<pallas_src>
import functools

import jax
import jax.numpy as jnp
from jax.experimental import pallas as pl
from jax.experimental.pallas import tpu as pltpu


def _attention_head_kernel(x_ref, wq_ref, wk_ref, wv_ref,
                           bq_ref, bk_ref, bv_ref,
                           wp_ref, bp_ref,
                           o_ref, acc_ref, *, bb: int, n_tokens: int):
    """One grid step = (one batch block) x (one attention head).

    x_ref  : (bb*N, D)   bf16   activations for bb samples (flattened rows)
    wq/wk/wv_ref : (1, D, hd)  bf16  per-head projection slabs
    bq/bk/bv_ref : (1, 1, hd)  f32   per-head biases (scale folded into q)
    wp_ref : (1, hd, D)  bf16   per-head slice of the output projection
    bp_ref : (1, D)      f32    output-projection bias (added once, last head)
    o_ref  : (bb*N, D)          output block (resident across the head axis)
    acc_ref: (bb*N, D)   f32    VMEM accumulator over heads
    """
    h = pl.program_id(1)

    @pl.when(h == 0)
    def _init():
        acc_ref[...] = jnp.zeros_like(acc_ref)

    xb = x_ref[...]                                              # (bb*N, D) bf16

    def proj(w_ref, b_ref):
        y = jnp.dot(xb, w_ref[0], preferred_element_type=jnp.float32)
        return y + b_ref[0]                                      # (bb*N, hd) f32

    q = proj(wq_ref, bq_ref)        # softmax scale already folded into wq/bq
    k = proj(wk_ref, bk_ref)
    v = proj(wv_ref, bv_ref)

    hd = q.shape[-1]
    q3 = q.reshape(bb, n_tokens, hd).astype(jnp.bfloat16)
    k3 = k.reshape(bb, n_tokens, hd).astype(jnp.bfloat16)
    v3 = v.reshape(bb, n_tokens, hd).astype(jnp.bfloat16)

    # scores, batched over the samples in this block (single batch dim)
    s = jnp.einsum("bqd,bkd->bqk", q3, k3,
                   preferred_element_type=jnp.float32)           # (bb, N, N) f32

    # numerically-stable softmax; normalization deferred past the PV matmul
    m = jnp.max(s, axis=-1, keepdims=True)
    e = jnp.exp(s - m)
    denom = jnp.sum(e, axis=-1, keepdims=True)

    ctx = jnp.einsum("bqk,bkd->bqd", e.astype(jnp.bfloat16), v3,
                     preferred_element_type=jnp.float32)         # (bb, N, hd)
    ctx = ctx * pl.reciprocal(denom, approx=True)                # (N*hd work, EUP)

    # this head's contribution to the output projection
    ctx2 = ctx.reshape(bb * n_tokens, hd).astype(jnp.bfloat16)
    acc_ref[...] += jnp.dot(ctx2, wp_ref[0],
                            preferred_element_type=jnp.float32)  # (bb*N, D)

    @pl.when(h == pl.num_programs(1) - 1)
    def _finalize():
        o_ref[...] = (acc_ref[...] + bp_ref[...]).astype(o_ref.dtype)


def _pick_batch_block(B, n_tokens, dim, n_heads):
    """Largest divisor bb of B so the (bb*N, D) block feeds the MXU well while
    the per-step working set stays small and the (8,128) block rule holds."""
    head_dim = dim // n_heads
    best = 1
    for bb in range(2, B + 1):
        if B % bb:
            continue
        rows = bb * n_tokens
        if rows % 8 != 0 and rows != B * n_tokens:
            continue                      # keep 2nd-to-last block dim legal
        if rows > 256:
            continue                      # enough M already; stop growing
        est_words = (5 * rows * dim                      # x/out blocks + acc
                     + 2 * bb * n_tokens * n_tokens      # scores + exp
                     + 4 * rows * head_dim)              # q, k, v, ctx
        if est_words * 4 > 8 * 1024 * 1024:
            continue
        best = bb
    return best


def attention_pallas(x, w_qkv, b_qkv, w_proj, b_proj, *, n_heads: int):
    """x: (B, N, D). Returns (B, N, D). Same math as the PyTorch module."""
    B, N, D = x.shape
    assert D % n_heads == 0, "dim must be divisible by n_heads"
    H = n_heads
    hd = D // H
    scale = float(hd) ** -0.5
    out_dtype = x.dtype

    # ---- parameter re-layout: per-head, lane-aligned slabs -----------------
    def split_heads_w(w):                 # (D, D) -> (H, D, hd)
        return jnp.transpose(w.reshape(D, H, hd), (1, 0, 2))

    def split_heads_b(b):                 # (D,) -> (H, 1, hd)
        return b.reshape(H, 1, hd)

    wq = split_heads_w(w_qkv[:, 0 * D:1 * D]) * scale     # fold scale into q
    wk = split_heads_w(w_qkv[:, 1 * D:2 * D])
    wv = split_heads_w(w_qkv[:, 2 * D:3 * D])
    bq = split_heads_b(b_qkv[0, 0 * D:1 * D]) * scale
    bk = split_heads_b(b_qkv[0, 1 * D:2 * D])
    bv = split_heads_b(b_qkv[0, 2 * D:3 * D])
    wp = w_proj.reshape(H, hd, D)         # rows already in concat(head) order
    bp = b_proj.reshape(1, D)

    # bf16 operands for the MXU (f32 accumulation inside the kernel);
    # biases / softmax path stay f32.
    wq = wq.astype(jnp.bfloat16)
    wk = wk.astype(jnp.bfloat16)
    wv = wv.astype(jnp.bfloat16)
    wp = wp.astype(jnp.bfloat16)
    bq = bq.astype(jnp.float32)
    bk = bk.astype(jnp.float32)
    bv = bv.astype(jnp.float32)
    bp = bp.astype(jnp.float32)

    bb = _pick_batch_block(B, N, D, H)
    rows_blk = bb * N
    Mrows = B * N
    x2 = x.reshape(Mrows, D).astype(jnp.bfloat16)

    kernel = functools.partial(_attention_head_kernel, bb=bb, n_tokens=N)

    grid_spec = pltpu.PrefetchScalarGridSpec(
        num_scalar_prefetch=0,
        grid=(B // bb, H),                 # (parallel batch blocks, head reduction)
        in_specs=[
            pl.BlockSpec((rows_blk, D), lambda i, h: (i, 0)),     # x (resident over h)
            pl.BlockSpec((1, D, hd), lambda i, h: (h, 0, 0)),     # w_q head slab
            pl.BlockSpec((1, D, hd), lambda i, h: (h, 0, 0)),     # w_k head slab
            pl.BlockSpec((1, D, hd), lambda i, h: (h, 0, 0)),     # w_v head slab
            pl.BlockSpec((1, 1, hd), lambda i, h: (h, 0, 0)),     # b_q
            pl.BlockSpec((1, 1, hd), lambda i, h: (h, 0, 0)),     # b_k
            pl.BlockSpec((1, 1, hd), lambda i, h: (h, 0, 0)),     # b_v
            pl.BlockSpec((1, hd, D), lambda i, h: (h, 0, 0)),     # w_proj head slab
            pl.BlockSpec((1, D), lambda i, h: (0, 0)),            # b_proj
        ],
        out_specs=pl.BlockSpec((rows_blk, D), lambda i, h: (i, 0)),
        scratch_shapes=[pltpu.VMEM((rows_blk, D), jnp.float32)],
    )

    flops = (2 * Mrows * D * 3 * D          # qkv projection
             + 4 * Mrows * N * D            # QK^T + PV across all heads
             + 2 * Mrows * D * D)           # output projection
    bytes_accessed = (int(x2.size) * 2
                      + Mrows * D * jnp.dtype(out_dtype).itemsize
                      + sum(int(t.size) * t.dtype.itemsize
                            for t in (wq, wk, wv, wp, bq, bk, bv, bp)))
    cost = pl.CostEstimate(flops=int(flops),
                           transcendentals=int(B * H * N * N),
                           bytes_accessed=int(bytes_accessed))

    out2 = pl.pallas_call(
        kernel,
        out_shape=jax.ShapeDtypeStruct((Mrows, D), out_dtype),
        grid_spec=grid_spec,
        compiler_params=pltpu.CompilerParams(
            dimension_semantics=("parallel", "arbitrary"),
            vmem_limit_bytes=32 * 1024 * 1024),
        cost_estimate=cost,
    )(x2, wq, wk, wv, bq, bk, bv, wp, bp)

    return out2.reshape(B, N, D)


def attention_reference(x, w_qkv, b_qkv, w_proj, b_proj, *, n_heads: int):
    """Pure-JAX reference mirroring the PyTorch forward exactly (f32)."""
    B, N, D = x.shape
    hd = D // n_heads
    scale = float(hd) ** -0.5
    qkv = jnp.einsum("bnd,de->bne", x, w_qkv) + b_qkv[0]          # (B, N, 3D)
    qkv = qkv.reshape(B, N, 3, n_heads, hd).transpose(2, 0, 3, 1, 4)
    q, k, v = qkv[0], qkv[1], qkv[2]                              # (B, H, N, hd)
    dp = jnp.einsum("bhqd,bhkd->bhqk", q, k) * scale
    attn = jax.nn.softmax(dp, axis=-1)
    wa = jnp.einsum("bhqk,bhkd->bhqd", attn, v)                   # (B, H, N, hd)
    wa = wa.transpose(0, 2, 1, 3).reshape(B, N, D)
    return jnp.einsum("bnd,de->bne", wa, w_proj) + b_proj[0]


if __name__ == "__main__":
    B, N, D, H = 2, 8, 32, 4   # n_samples, n_tokens(=n_patches+1), dim, n_heads

    key = jax.random.PRNGKey(0)
    kx, k1, k2, k3, k4 = jax.random.split(key, 5)

    x = jax.random.normal(kx, (B, N, D), dtype=jnp.float32)

    # Deterministic synthetic parameters (shapes from nn.Linear(dim, 3*dim),
    # nn.Linear(dim, dim); stored transposed for y = x @ W + b).
    w_qkv = jax.random.normal(k1, (D, 3 * D), dtype=jnp.float32) * 0.05
    b_qkv = jax.random.normal(k2, (1, 3 * D), dtype=jnp.float32) * 0.01
    w_proj = jax.random.normal(k3, (D, D), dtype=jnp.float32) * 0.05
    b_proj = jax.random.normal(k4, (1, D), dtype=jnp.float32) * 0.01

    out = attention_pallas(x, w_qkv, b_qkv, w_proj, b_proj, n_heads=H)
    out = jax.block_until_ready(out)

    ref = attention_reference(x, w_qkv, b_qkv, w_proj, b_proj, n_heads=H)
    assert out.shape == (B, N, D)
    max_err = float(jnp.max(jnp.abs(out - ref)))
    # bf16 MXU operands + approx reciprocal -> loosen tolerance vs f32 reference
    assert jnp.allclose(out, ref, atol=2e-2, rtol=2e-2), (
        f"mismatch vs reference (max abs err {max_err:.3e})")

    print("KERNEL_OK")
</pallas_src>

<mosaic_0001>
module attributes {stable_mosaic.version = 11 : i64} {
  func.func @_attention_head_kernel(%arg0: i32, %arg1: i32, %arg2: memref<16x32xbf16, #tpu.memory_space<vmem>>, %arg3: memref<1x32x8xbf16, #tpu.memory_space<vmem>>, %arg4: memref<1x32x8xbf16, #tpu.memory_space<vmem>>, %arg5: memref<1x32x8xbf16, #tpu.memory_space<vmem>>, %arg6: memref<1x1x8xf32, #tpu.memory_space<vmem>>, %arg7: memref<1x1x8xf32, #tpu.memory_space<vmem>>, %arg8: memref<1x1x8xf32, #tpu.memory_space<vmem>>, %arg9: memref<1x8x32xbf16, #tpu.memory_space<vmem>>, %arg10: memref<1x32xf32, #tpu.memory_space<vmem>>, %arg11: memref<16x32xf32, #tpu.memory_space<vmem>>, %arg12: memref<16x32xf32, #tpu.memory_space<vmem>>) attributes {dimension_semantics = [#tpu.dimension_semantics<parallel>, #tpu.dimension_semantics<arbitrary>], iteration_bounds = array<i64: 1, 4>, scalar_prefetch = 0 : i64, scratch_operands = 1 : i64, tpu.core_type = #tpu.core_type<tc>, window_params = [{transform_indices = @transform_0, window_bounds = array<i64: 16, 32>}, {transform_indices = @transform_1, window_bounds = array<i64: 1, 32, 8>}, {transform_indices = @transform_2, window_bounds = array<i64: 1, 32, 8>}, {transform_indices = @transform_3, window_bounds = array<i64: 1, 32, 8>}, {transform_indices = @transform_4, window_bounds = array<i64: 1, 1, 8>}, {transform_indices = @transform_5, window_bounds = array<i64: 1, 1, 8>}, {transform_indices = @transform_6, window_bounds = array<i64: 1, 1, 8>}, {transform_indices = @transform_7, window_bounds = array<i64: 1, 8, 32>}, {pipeline_mode = #tpu.pipeline_mode<synchronous>, transform_indices = @transform_8, window_bounds = array<i64: 1, 32>}, {transform_indices = @transform_9, window_bounds = array<i64: 16, 32>}]} {
    %c0_i32 = arith.constant 0 : i32
    %0 = arith.cmpi eq, %arg1, %c0_i32 : i32
    %1 = arith.extui %0 : i1 to i32
    %c0_i32_0 = arith.constant 0 : i32
    %2 = arith.cmpi ne, %1, %c0_i32_0 : i32
    scf.if %2 {
      %cst_35 = arith.constant 0.000000e+00 : f32
      %55 = vector.broadcast %cst_35 : f32 to vector<16x32xf32>
      %c0_36 = arith.constant 0 : index
      %c0_37 = arith.constant 0 : index
      %56 = vector.load %arg12[%c0_36, %c0_37] : memref<16x32xf32, #tpu.memory_space<vmem>>, vector<16x32xf32>
      tpu.vector_store %arg12[%c0_36, %c0_37], %55 {strides = array<i32>} : memref<16x32xf32, #tpu.memory_space<vmem>>, vector<16x32xf32>,
    } else {
    }
    %c0 = arith.constant 0 : index
    %c0_1 = arith.constant 0 : index
    %3 = vector.load %arg2[%c0, %c0_1] : memref<16x32xbf16, #tpu.memory_space<vmem>>, vector<16x32xbf16>
    %c0_2 = arith.constant 0 : index
    %c0_3 = arith.constant 0 : index
    %c0_4 = arith.constant 0 : index
    %4 = vector.load %arg3[%c0_2, %c0_3, %c0_4] : memref<1x32x8xbf16, #tpu.memory_space<vmem>>, vector<1x32x8xbf16>
    %5 = vector.shape_cast %4 : vector<1x32x8xbf16> to vector<32x8xbf16>
    %cst = arith.constant dense<0.000000e+00> : vector<16x8xf32>
    %6 = tpu.matmul %3, %5, %cst {dimension_numbers = #tpu.dot_dimension_numbers<[1], [0], [0], [1], [0, 0, 1, 1], [], []>} : vector<16x32xbf16>, vector<32x8xbf16>, vector<16x8xf32> -> vector<16x8xf32>
    %c0_5 = arith.constant 0 : index
    %c0_6 = arith.constant 0 : index
    %c0_7 = arith.constant 0 : index
    %7 = vector.load %arg6[%c0_5, %c0_6, %c0_7] : memref<1x1x8xf32, #tpu.memory_space<vmem>>, vector<1x1x8xf32>
    %8 = vector.shape_cast %7 : vector<1x1x8xf32> to vector<1x8xf32>
    %9 = vector.broadcast %8 : vector<1x8xf32> to vector<16x8xf32>
    %10 = arith.addf %6, %9 : vector<16x8xf32>
    %c0_8 = arith.constant 0 : index
    %c0_9 = arith.constant 0 : index
    %c0_10 = arith.constant 0 : index
    %11 = vector.load %arg4[%c0_8, %c0_9, %c0_10] : memref<1x32x8xbf16, #tpu.memory_space<vmem>>, vector<1x32x8xbf16>
    %12 = vector.shape_cast %11 : vector<1x32x8xbf16> to vector<32x8xbf16>
    %cst_11 = arith.constant dense<0.000000e+00> : vector<16x8xf32>
    %13 = tpu.matmul %3, %12, %cst_11 {dimension_numbers = #tpu.dot_dimension_numbers<[1], [0], [0], [1], [0, 0, 1, 1], [], []>} : vector<16x32xbf16>, vector<32x8xbf16>, vector<16x8xf32> -> vector<16x8xf32>
    %c0_12 = arith.constant 0 : index
    %c0_13 = arith.constant 0 : index
    %c0_14 = arith.constant 0 : index
    %14 = vector.load %arg7[%c0_12, %c0_13, %c0_14] : memref<1x1x8xf32, #tpu.memory_space<vmem>>, vector<1x1x8xf32>
    %15 = vector.shape_cast %14 : vector<1x1x8xf32> to vector<1x8xf32>
    %16 = vector.broadcast %15 : vector<1x8xf32> to vector<16x8xf32>
    %17 = arith.addf %13, %16 : vector<16x8xf32>
    %c0_15 = arith.constant 0 : index
    %c0_16 = arith.constant 0 : index
    %c0_17 = arith.constant 0 : index
    %18 = vector.load %arg5[%c0_15, %c0_16, %c0_17] : memref<1x32x8xbf16, #tpu.memory_space<vmem>>, vector<1x32x8xbf16>
    %19 = vector.shape_cast %18 : vector<1x32x8xbf16> to vector<32x8xbf16>
    %cst_18 = arith.constant dense<0.000000e+00> : vector<16x8xf32>
    %20 = tpu.matmul %3, %19, %cst_18 {dimension_numbers = #tpu.dot_dimension_numbers<[1], [0], [0], [1], [0, 0, 1, 1], [], []>} : vector<16x32xbf16>, vector<32x8xbf16>, vector<16x8xf32> -> vector<16x8xf32>
    %c0_19 = arith.constant 0 : index
    %c0_20 = arith.constant 0 : index
    %c0_21 = arith.constant 0 : index
    %21 = vector.load %arg8[%c0_19, %c0_20, %c0_21] : memref<1x1x8xf32, #tpu.memory_space<vmem>>, vector<1x1x8xf32>
    %22 = vector.shape_cast %21 : vector<1x1x8xf32> to vector<1x8xf32>
    %23 = vector.broadcast %22 : vector<1x8xf32> to vector<16x8xf32>
    %24 = arith.addf %20, %23 : vector<16x8xf32>
    %25 = vector.shape_cast %10 : vector<16x8xf32> to vector<2x8x8xf32>
    %26 = arith.truncf %25 : vector<2x8x8xf32> to vector<2x8x8xbf16>
    %27 = vector.shape_cast %17 : vector<16x8xf32> to vector<2x8x8xf32>
    %28 = arith.truncf %27 : vector<2x8x8xf32> to vector<2x8x8xbf16>
    %29 = vector.shape_cast %24 : vector<16x8xf32> to vector<2x8x8xf32>
    %30 = arith.truncf %29 : vector<2x8x8xf32> to vector<2x8x8xbf16>
    "tpu.trace_start"() <{level = 10 : i32, message = "bqd,bkd->bqk"}> : () -> ()
    %cst_22 = arith.constant dense<0.000000e+00> : vector<2x8x8xf32>
    %31 = tpu.matmul %26, %28, %cst_22 {dimension_numbers = #tpu.dot_dimension_numbers<[2], [2], [1], [1], [0, 0, 0, 1, 1, 1], [0], [0]>} : vector<2x8x8xbf16>, vector<2x8x8xbf16>, vector<2x8x8xf32> -> vector<2x8x8xf32>
    "tpu.trace_stop"() : () -> ()
    %cst_23 = arith.constant dense<0xFF800000> : vector<2x8xf32>
    %32 = vector.multi_reduction <maximumf>, %31, %cst_23 [2] : vector<2x8x8xf32> to vector<2x8xf32>
    %33 = vector.shape_cast %32 : vector<2x8xf32> to vector<2x8x1xf32>
    %34 = vector.broadcast %33 : vector<2x8x1xf32> to vector<2x8x8xf32>
    %35 = arith.subf %31, %34 : vector<2x8x8xf32>
    %36 = math.exp %35 : vector<2x8x8xf32>
    %cst_24 = arith.constant dense<0.000000e+00> : vector<2x8xf32>
    %37 = vector.multi_reduction <add>, %36, %cst_24 [2] : vector<2x8x8xf32> to vector<2x8xf32>
    %38 = vector.shape_cast %37 : vector<2x8xf32> to vector<2x8x1xf32>
    %39 = arith.truncf %36 : vector<2x8x8xf32> to vector<2x8x8xbf16>
    "tpu.trace_start"() <{level = 10 : i32, message = "bqk,bkd->bqd"}> : () -> ()
    %cst_25 = arith.constant dense<0.000000e+00> : vector<2x8x8xf32>
    %40 = tpu.matmul %39, %30, %cst_25 {dimension_numbers = #tpu.dot_dimension_numbers<[2], [1], [1], [2], [0, 0, 0, 1, 1, 2], [0], [0]>} : vector<2x8x8xbf16>, vector<2x8x8xbf16>, vector<2x8x8xf32> -> vector<2x8x8xf32>
    "tpu.trace_stop"() : () -> ()
    %41 = tpu.reciprocal %38 {approx = true} : vector<2x8x1xf32> -> vector<2x8x1xf32>
    %42 = vector.broadcast %41 : vector<2x8x1xf32> to vector<2x8x8xf32>
    %43 = arith.mulf %40, %42 : vector<2x8x8xf32>
    %44 = vector.shape_cast %43 : vector<2x8x8xf32> to vector<16x8xf32>
    %45 = arith.truncf %44 : vector<16x8xf32> to vector<16x8xbf16>
    %c0_26 = arith.constant 0 : index
    %c0_27 = arith.constant 0 : index
    %46 = vector.load %arg12[%c0_26, %c0_27] : memref<16x32xf32, #tpu.memory_space<vmem>>, vector<16x32xf32>
    %c0_28 = arith.constant 0 : index
    %c0_29 = arith.constant 0 : index
    %c0_30 = arith.constant 0 : index
    %47 = vector.load %arg9[%c0_28, %c0_29, %c0_30] : memref<1x8x32xbf16, #tpu.memory_space<vmem>>, vector<1x8x32xbf16>
    %48 = vector.shape_cast %47 : vector<1x8x32xbf16> to vector<8x32xbf16>
    %cst_31 = arith.constant dense<0.000000e+00> : vector<16x32xf32>
    %49 = tpu.matmul %45, %48, %cst_31 {dimension_numbers = #tpu.dot_dimension_numbers<[1], [0], [0], [1], [0, 0, 1, 1], [], []>} : vector<16x8xbf16>, vector<8x32xbf16>, vector<16x32xf32> -> vector<16x32xf32>
    %50 = arith.addf %46, %49 : vector<16x32xf32>
    %c0_32 = arith.constant 0 : index
    %c0_33 = arith.constant 0 : index
    %51 = vector.load %arg12[%c0_32, %c0_33] : memref<16x32xf32, #tpu.memory_space<vmem>>, vector<16x32xf32>
    tpu.vector_store %arg12[%c0_32, %c0_33], %50 {strides = array<i32>} : memref<16x32xf32, #tpu.memory_space<vmem>>, vector<16x32xf32>,
    %c3_i32 = arith.constant 3 : i32
    %52 = arith.cmpi eq, %arg1, %c3_i32 : i32
    %53 = arith.extui %52 : i1 to i32
    %c0_i32_34 = arith.constant 0 : i32
    %54 = arith.cmpi ne, %53, %c0_i32_34 : i32
    scf.if %54 {
      %c0_35 = arith.constant 0 : index
      %c0_36 = arith.constant 0 : index
      %55 = vector.load %arg12[%c0_35, %c0_36] : memref<16x32xf32, #tpu.memory_space<vmem>>, vector<16x32xf32>
      %c0_37 = arith.constant 0 : index
      %c0_38 = arith.constant 0 : index
      %56 = vector.load %arg10[%c0_37, %c0_38] : memref<1x32xf32, #tpu.memory_space<vmem>>, vector<1x32xf32>
      %57 = vector.broadcast %56 : vector<1x32xf32> to vector<16x32xf32>
      %58 = arith.addf %55, %57 : vector<16x32xf32>
      %c0_39 = arith.constant 0 : index
      %c0_40 = arith.constant 0 : index
      %59 = vector.load %arg11[%c0_39, %c0_40] : memref<16x32xf32, #tpu.memory_space<vmem>>, vector<16x32xf32>
      tpu.vector_store %arg11[%c0_39, %c0_40], %58 {strides = array<i32>} : memref<16x32xf32, #tpu.memory_space<vmem>>, vector<16x32xf32>,
    } else {
    }
    return
  }
  func.func @transform_0(%arg0: i32, %arg1: i32) -> (i32, i32) {
    %c0_i32 = arith.constant 0 : i32
    %c0_i32_0 = arith.constant 0 : i32
    return %arg0, %c0_i32 : i32, i32
  }
  func.func @transform_1(%arg0: i32, %arg1: i32) -> (i32, i32, i32) {
    %c0_i32 = arith.constant 0 : i32
    %c0_i32_0 = arith.constant 0 : i32
    %c0_i32_1 = arith.constant 0 : i32
    return %arg1, %c0_i32, %c0_i32_0 : i32, i32, i32
  }
  func.func @transform_2(%arg0: i32, %arg1: i32) -> (i32, i32, i32) {
    %c0_i32 = arith.constant 0 : i32
    %c0_i32_0 = arith.constant 0 : i32
    %c0_i32_1 = arith.constant 0 : i32
    return %arg1, %c0_i32, %c0_i32_0 : i32, i32, i32
  }
  func.func @transform_3(%arg0: i32, %arg1: i32) -> (i32, i32, i32) {
    %c0_i32 = arith.constant 0 : i32
    %c0_i32_0 = arith.constant 0 : i32
    %c0_i32_1 = arith.constant 0 : i32
    return %arg1, %c0_i32, %c0_i32_0 : i32, i32, i32
  }
  func.func @transform_4(%arg0: i32, %arg1: i32) -> (i32, i32, i32) {
    %c0_i32 = arith.constant 0 : i32
    %c0_i32_0 = arith.constant 0 : i32
    %c0_i32_1 = arith.constant 0 : i32
    return %arg1, %c0_i32, %c0_i32_0 : i32, i32, i32
  }
  func.func @transform_5(%arg0: i32, %arg1: i32) -> (i32, i32, i32) {
    %c0_i32 = arith.constant 0 : i32
    %c0_i32_0 = arith.constant 0 : i32
    %c0_i32_1 = arith.constant 0 : i32
    return %arg1, %c0_i32, %c0_i32_0 : i32, i32, i32
  }
  func.func @transform_6(%arg0: i32, %arg1: i32) -> (i32, i32, i32) {
    %c0_i32 = arith.constant 0 : i32
    %c0_i32_0 = arith.constant 0 : i32
    %c0_i32_1 = arith.constant 0 : i32
    return %arg1, %c0_i32, %c0_i32_0 : i32, i32, i32
  }
  func.func @transform_7(%arg0: i32, %arg1: i32) -> (i32, i32, i32) {
    %c0_i32 = arith.constant 0 : i32
    %c0_i32_0 = arith.constant 0 : i32
    %c0_i32_1 = arith.constant 0 : i32
    return %arg1, %c0_i32, %c0_i32_0 : i32, i32, i32
  }
  func.func @transform_8(%arg0: i32, %arg1: i32) -> (i32, i32) {
    %c0_i32 = arith.constant 0 : i32
    %c0_i32_0 = arith.constant 0 : i32
    %c0_i32_1 = arith.constant 0 : i32
    return %c0_i32, %c0_i32_0 : i32, i32
  }
  func.func @transform_9(%arg0: i32, %arg1: i32) -> (i32, i32) {
    %c0_i32 = arith.constant 0 : i32
    %c0_i32_0 = arith.constant 0 : i32
    return %arg0, %c0_i32 : i32, i32
  }
}

</mosaic_0001>

<llo_original>
// kernel: tpu_custom_call.1
$region0: #{tpu_custom_call.1}
  #allocation0 [shape = 'u32[]', space=smem, size = 0x4, offset = 0x4, fixed_abs, tag = 'smem constant byte address 0x4 - core index']
  #allocation1 [shape = 'u32[72,128]{1,0:T(1,128)}', space=vmem, size = 0x9000, scoped, tag = 'internal scratch']
  #allocation2 [shape = 'f32[16,32]{1,0:T(8,128)}', space=vmem, size = 0x2000, scoped, tag = 'scratch operand']
  %s0 = inlined_call_operand.vmem [shape: bf16[16,32], index: 0, kind: input, shape index: {}]
  %s1 = inlined_call_operand.vmem [shape: bf16[4,32,8], index: 1, kind: input, shape index: {}]
  %s2 = inlined_call_operand.vmem [shape: bf16[4,32,8], index: 2, kind: input, shape index: {}]
  %s3 = inlined_call_operand.vmem [shape: bf16[4,32,8], index: 3, kind: input, shape index: {}]
  %s4 = inlined_call_operand.vmem [shape: f32[4,1,8], index: 4, kind: input, shape index: {}]
  %s5 = inlined_call_operand.vmem [shape: f32[4,1,8], index: 5, kind: input, shape index: {}]
  %s6 = inlined_call_operand.vmem [shape: f32[4,1,8], index: 6, kind: input, shape index: {}]
  %s7 = inlined_call_operand.vmem [shape: bf16[4,8,32], index: 7, kind: input, shape index: {}]
  %s8 = inlined_call_operand.vmem [shape: f32[1,32], index: 8, kind: input, shape index: {}]
  %s9 = inlined_call_operand.hbm [shape: f32[16,32], index: 9, kind: output, shape index: {}]
  %s10 = sld [smem:[#allocation0]]
  $region77: #{tpu_custom_call.1} parent=0
    _
  %s12 = ssub.s32 1, %s10
  %s13 = scalar_select 0, %s12, %s10
  $region1: #{tpu_custom_call.1} parent=0
    #allocation3 [shape = 'u8[8192]{0}', space=vmem, size = 0x2000, scoped, tag = 'output window, operand 0, single buffered']
    #allocation4 [shape = 's32[2]{0}', space=sflag, size = 0x8, scoped, tag = 'scoped memory for tpu_custom_call.1']
    %14 = vsyncpa [#allocation4], 0
    loop: start=0, step=1, limit=6
    $region2: #{tpu_custom_call.1} parent=1 // loop_pre_header
      _
    $region3: #{tpu_custom_call.1} parent=1 // loop_header
      %s16 = sphi 0, %s20
      %p17 = scmp.ge.s32.totalorder %s16, 6
      %s23 = sphi 0, %s35
      %s24 = sphi 0, %s31
      %s25 = sphi 0, %s23
      %s26 = sphi 0, %s24
      %s27 = sphi 0, %s25
      %s28 = sphi 0, %s26
      %s38 = sphi 0, %s40
      %s41 = sphi 0, %s38
      %s42 = sphi 0, %s41
      %s58 = sphi 0, %s42
      %s64 = sphi 0, %s66
      %s67 = sphi 0, %s64
      %s68 = sphi 0, %s67
      %s84 = sphi 0, %s68
      %s90 = sphi 0, %s92
      %s93 = sphi 0, %s90
      %s94 = sphi 0, %s93
      %s110 = sphi 0, %s94
      %s116 = sphi 0, %s118
      %s119 = sphi 0, %s116
      %s120 = sphi 0, %s119
      %s136 = sphi 0, %s120
      %s142 = sphi 0, %s144
      %s145 = sphi 0, %s142
      %s146 = sphi 0, %s145
      %s162 = sphi 0, %s146
      %s168 = sphi 0, %s170
      %s171 = sphi 0, %s168
      %s172 = sphi 0, %s171
      %s188 = sphi 0, %s172
      %s194 = sphi 0, %s196
      %s197 = sphi 0, %s194
      %s198 = sphi 0, %s197
      %s214 = sphi 0, %s198
      %s220 = sphi 0, %s222
      %s223 = sphi 0, %s220
      %s224 = sphi 0, %s223
      %s240 = sphi 0, %s224
      %s244 = sphi 0, %s244
      %s246 = sphi 0, %s244
      %s247 = sphi 0, %s246
      %s261 = sphi 0, %s247
      %s267 = sphi 0, %s269
      %s270 = sphi 0, %s267
      %s271 = sphi 0, %s270
      %s287 = sphi 0, %s271
    $region4: #{tpu_custom_call.1} parent=1 // loop_header_branch
      %19 = sbr.rel (%p17) target = $region8
    $region5: #{tpu_custom_call.1} parent=1 // loop_body
      %s21 = ssub.s32 %s16, 1
      %s22 = ssub.s32 %s16, 2
      %s29 = sadd.s32 1, %s24
      %p30 = scmp.ge.s32.totalorder %s29, 4
      %s31 = scalar_select %p30, 0, %s29
      %s32 = sadd.s32 1, %s23
      %s33 = scalar_select %p30, %s32, %s23
      %p34 = scmp.ge.s32.totalorder %s33, 1
      %s35 = scalar_select %p34, 0, %s33
      %s36 = ssub.s32 %s23, %s35
      %p37 = scmp.eq.s32.totalorder %s36, 0
      %s39 = sadd.s32 %s38, 1
      %s40 = scalar_select %p37, %s38, %s39
      %p43 = pneg %p37
      %p44 = scmp.eq.s32.totalorder %s16, 3
      %p45 = por %p43, %p44
      %p46 = scmp.ne.s32.totalorder %s38, %s41
      %p47 = scmp.eq.s32.totalorder %s16, 0
      %p48 = por %p46, %p47
      %p49 = scmp.ne.s32.totalorder %s38, %s41
      %p50 = scmp.eq.s32.totalorder %s21, 3
      %p51 = por %p49, %p50
      %p52 = scmp.ne.s32.totalorder %s41, %s42
      %p53 = scmp.eq.s32.totalorder %s21, 0
      %p54 = por %p52, %p53
      %p55 = scmp.ne.s32.totalorder %s41, %s42
      %p56 = scmp.eq.s32.totalorder %s22, 3
      %p57 = por %p55, %p56
      %p59 = scmp.ne.s32.totalorder %s42, %s58
      %p60 = scmp.eq.s32.totalorder %s22, 0
      %p61 = por %p59, %p60
      %s62 = ssub.s32 %s24, %s31
      %p63 = scmp.eq.s32.totalorder %s62, 0
      %s65 = sadd.s32 %s64, 1
      %s66 = scalar_select %p63, %s64, %s65
      %p69 = pneg %p63
      %p70 = scmp.eq.s32.totalorder %s16, 3
      %p71 = por %p69, %p70
      %p72 = scmp.ne.s32.totalorder %s64, %s67
      %p73 = scmp.eq.s32.totalorder %s16, 0
      %p74 = por %p72, %p73
      %p75 = scmp.ne.s32.totalorder %s64, %s67
      %p76 = scmp.eq.s32.totalorder %s21, 3
      %p77 = por %p75, %p76
      %p78 = scmp.ne.s32.totalorder %s67, %s68
      %p79 = scmp.eq.s32.totalorder %s21, 0
      %p80 = por %p78, %p79
      %p81 = scmp.ne.s32.totalorder %s67, %s68
      %p82 = scmp.eq.s32.totalorder %s22, 3
      %p83 = por %p81, %p82
      %p85 = scmp.ne.s32.totalorder %s68, %s84
      %p86 = scmp.eq.s32.totalorder %s22, 0
      %p87 = por %p85, %p86
      %s88 = ssub.s32 %s24, %s31
      %p89 = scmp.eq.s32.totalorder %s88, 0
      %s91 = sadd.s32 %s90, 1
      %s92 = scalar_select %p89, %s90, %s91
      %p95 = pneg %p89
      %p96 = scmp.eq.s32.totalorder %s16, 3
      %p97 = por %p95, %p96
      %p98 = scmp.ne.s32.totalorder %s90, %s93
      %p99 = scmp.eq.s32.totalorder %s16, 0
      %p100 = por %p98, %p99
      %p101 = scmp.ne.s32.totalorder %s90, %s93
      %p102 = scmp.eq.s32.totalorder %s21, 3
      %p103 = por %p101, %p102
      %p104 = scmp.ne.s32.totalorder %s93, %s94
      %p105 = scmp.eq.s32.totalorder %s21, 0
      %p106 = por %p104, %p105
      %p107 = scmp.ne.s32.totalorder %s93, %s94
      %p108 = scmp.eq.s32.totalorder %s22, 3
      %p109 = por %p107, %p108
      %p111 = scmp.ne.s32.totalorder %s94, %s110
      %p112 = scmp.eq.s32.totalorder %s22, 0
      %p113 = por %p111, %p112
      %s114 = ssub.s32 %s24, %s31
      %p115 = scmp.eq.s32.totalorder %s114, 0
      %s117 = sadd.s32 %s116, 1
      %s118 = scalar_select %p115, %s116, %s117
      %p121 = pneg %p115
      %p122 = scmp.eq.s32.totalorder %s16, 3
      %p123 = por %p121, %p122
      %p124 = scmp.ne.s32.totalorder %s116, %s119
      %p125 = scmp.eq.s32.totalorder %s16, 0
      %p126 = por %p124, %p125
      %p127 = scmp.ne.s32.totalorder %s116, %s119
      %p128 = scmp.eq.s32.totalorder %s21, 3
      %p129 = por %p127, %p128
      %p130 = scmp.ne.s32.totalorder %s119, %s120
      %p131 = scmp.eq.s32.totalorder %s21, 0
      %p132 = por %p130, %p131
      %p133 = scmp.ne.s32.totalorder %s119, %s120
      %p134 = scmp.eq.s32.totalorder %s22, 3
      %p135 = por %p133, %p134
      %p137 = scmp.ne.s32.totalorder %s120, %s136
      %p138 = scmp.eq.s32.totalorder %s22, 0
      %p139 = por %p137, %p138
      %s140 = ssub.s32 %s24, %s31
      %p141 = scmp.eq.s32.totalorder %s140, 0
      %s143 = sadd.s32 %s142, 1
      %s144 = scalar_select %p141, %s142, %s143
      %p147 = pneg %p141
      %p148 = scmp.eq.s32.totalorder %s16, 3
      %p149 = por %p147, %p148
      %p150 = scmp.ne.s32.totalorder %s142, %s145
      %p151 = scmp.eq.s32.totalorder %s16, 0
      %p152 = por %p150, %p151
      %p153 = scmp.ne.s32.totalorder %s142, %s145
      %p154 = scmp.eq.s32.totalorder %s21, 3
      %p155 = por %p153, %p154
      %p156 = scmp.ne.s32.totalorder %s145, %s146
      %p157 = scmp.eq.s32.totalorder %s21, 0
      %p158 = por %p156, %p157
      %p159 = scmp.ne.s32.totalorder %s145, %s146
      %p160 = scmp.eq.s32.totalorder %s22, 3
      %p161 = por %p159, %p160
      %p163 = scmp.ne.s32.totalorder %s146, %s162
      %p164 = scmp.eq.s32.totalorder %s22, 0
      %p165 = por %p163, %p164
      %s166 = ssub.s32 %s24, %s31
      %p167 = scmp.eq.s32.totalorder %s166, 0
      %s169 = sadd.s32 %s168, 1
      %s170 = scalar_select %p167, %s168, %s169
      %p173 = pneg %p167
      %p174 = scmp.eq.s32.totalorder %s16, 3
      %p175 = por %p173, %p174
      %p176 = scmp.ne.s32.totalorder %s168, %s171
      %p177 = scmp.eq.s32.totalorder %s16, 0
      %p178 = por %p176, %p177
      %p179 = scmp.ne.s32.totalorder %s168, %s171
      %p180 = scmp.eq.s32.totalorder %s21, 3
      %p181 = por %p179, %p180
      %p182 = scmp.ne.s32.totalorder %s171, %s172
      %p183 = scmp.eq.s32.totalorder %s21, 0
      %p184 = por %p182, %p183
      %p185 = scmp.ne.s32.totalorder %s171, %s172
      %p186 = scmp.eq.s32.totalorder %s22, 3
      %p187 = por %p185, %p186
      %p189 = scmp.ne.s32.totalorder %s172, %s188
      %p190 = scmp.eq.s32.totalorder %s22, 0
      %p191 = por %p189, %p190
      %s192 = ssub.s32 %s24, %s31
      %p193 = scmp.eq.s32.totalorder %s192, 0
      %s195 = sadd.s32 %s194, 1
      %s196 = scalar_select %p193, %s194, %s195
      %p199 = pneg %p193
      %p200 = scmp.eq.s32.totalorder %s16, 3
      %p201 = por %p199, %p200
      %p202 = scmp.ne.s32.totalorder %s194, %s197
      %p203 = scmp.eq.s32.totalorder %s16, 0
      %p204 = por %p202, %p203
      %p205 = scmp.ne.s32.totalorder %s194, %s197
      %p206 = scmp.eq.s32.totalorder %s21, 3
      %p207 = por %p205, %p206
      %p208 = scmp.ne.s32.totalorder %s197, %s198
      %p209 = scmp.eq.s32.totalorder %s21, 0
      %p210 = por %p208, %p209
      %p211 = scmp.ne.s32.totalorder %s197, %s198
      %p212 = scmp.eq.s32.totalorder %s22, 3
      %p213 = por %p211, %p212
      %p215 = scmp.ne.s32.totalorder %s198, %s214
      %p216 = scmp.eq.s32.totalorder %s22, 0
      %p217 = por %p215, %p216
      %s218 = ssub.s32 %s24, %s31
      %p219 = scmp.eq.s32.totalorder %s218, 0
      %s221 = sadd.s32 %s220, 1
      %s222 = scalar_select %p219, %s220, %s221
      %p225 = pneg %p219
      %p226 = scmp.eq.s32.totalorder %s16, 3
      %p227 = por %p225, %p226
      %p228 = scmp.ne.s32.totalorder %s220, %s223
      %p229 = scmp.eq.s32.totalorder %s16, 0
      %p230 = por %p228, %p229
      %p231 = scmp.ne.s32.totalorder %s220, %s223
      %p232 = scmp.eq.s32.totalorder %s21, 3
      %p233 = por %p231, %p232
      %p234 = scmp.ne.s32.totalorder %s223, %s224
      %p235 = scmp.eq.s32.totalorder %s21, 0
      %p236 = por %p234, %p235
      %p237 = scmp.ne.s32.totalorder %s223, %s224
      %p238 = scmp.eq.s32.totalorder %s22, 3
      %p239 = por %p237, %p238
      %p241 = scmp.ne.s32.totalorder %s224, %s240
      %p242 = scmp.eq.s32.totalorder %s22, 0
      %p243 = por %p241, %p242
      %s245 = sadd.s32 %s244, 1
      %p248 = scmp.eq.s32.totalorder %s16, 3
      %p249 = scmp.ne.s32.totalorder %s244, %s246
      %p250 = scmp.eq.s32.totalorder %s16, 0
      %p251 = por %p249, %p250
      %p252 = scmp.ne.s32.totalorder %s244, %s246
      %p253 = scmp.eq.s32.totalorder %s21, 3
      %p254 = por %p252, %p253
      %p255 = scmp.ne.s32.totalorder %s246, %s247
      %p256 = scmp.eq.s32.totalorder %s21, 0
      %p257 = por %p255, %p256
      %p258 = scmp.ne.s32.totalorder %s246, %s247
      %p259 = scmp.eq.s32.totalorder %s22, 3
      %p260 = por %p258, %p259
      %p262 = scmp.ne.s32.totalorder %s247, %s261
      %p263 = scmp.eq.s32.totalorder %s22, 0
      %p264 = por %p262, %p263
      %s265 = ssub.s32 %s23, %s35
      %p266 = scmp.eq.s32.totalorder %s265, 0
      %s268 = sadd.s32 %s267, 1
      %s269 = scalar_select %p266, %s267, %s268
      %p272 = pneg %p266
      %p273 = scmp.eq.s32.totalorder %s16, 3
      %p274 = por %p272, %p273
      %p275 = scmp.ne.s32.totalorder %s267, %s270
      %p276 = scmp.eq.s32.totalorder %s16, 0
      %p277 = por %p275, %p276
      %p278 = scmp.ne.s32.totalorder %s267, %s270
      %p279 = scmp.eq.s32.totalorder %s21, 3
      %p280 = por %p278, %p279
      %p281 = scmp.ne.s32.totalorder %s270, %s271
      %p282 = scmp.eq.s32.totalorder %s21, 0
      %p283 = por %p281, %p282
      %p284 = scmp.ne.s32.totalorder %s270, %s271
      %p285 = scmp.eq.s32.totalorder %s22, 3
      %p286 = por %p284, %p285
      %p288 = scmp.ne.s32.totalorder %s271, %s287
      %p289 = scmp.eq.s32.totalorder %s22, 0
      %p290 = por %p288, %p289
      %p291 = scmp.le.s32.totalorder 1, %s16
      %p292 = scmp.lt.s32.totalorder %s16, 5
      %p293 = pnand %p291, %p292
      %p294 = pneg %p293
      // Predicated region
      $region9: #{tpu_custom_call.1} parent=5 // pred_check
        _
      $region10: #{tpu_custom_call.1} parent=5 // pred_check_branch
        %296 = sbr.rel (%p293) target = $region12
      $region11: #{tpu_custom_call.1} parent=5 // pred_region
        %s297 = ssub.s32 %s16, 1
        // Predicated region
        $region13: #{tpu_custom_call.1} parent=11 // pred_check
          %p298 = pneg %p54
        $region14: #{tpu_custom_call.1} parent=11 // pred_check_branch
          %300 = sbr.rel (%p298) target = $region16
        $region15: #{tpu_custom_call.1} parent=11 // pred_region
          %s301 = smul.u32 2, %s25
          %p302 = scmp.lt.s32.totalorder %s301, 1
          %s303 = scalar_select %p302, %s301, 1
          %s304 = smul.addr %s303, 4
          %s305 = scalar_lea.vmem %s0, %s304
          %s306 = smul.u32 2, %s25
        $region16: #{tpu_custom_call.1} parent=11 // pred_fallthru
          _
        // Predicated region
        $region17: #{tpu_custom_call.1} parent=11 // pred_check
          %p307 = pneg %p257
        $region18: #{tpu_custom_call.1} parent=11 // pred_check_branch
          %309 = sbr.rel (%p307) target = $region20
        $region19: #{tpu_custom_call.1} parent=11 // pred_region
          _
        $region20: #{tpu_custom_call.1} parent=11 // pred_fallthru
          _
      $region12: #{tpu_custom_call.1} parent=5 // pred_fallthru
        _
      %p310 = scmp.lt.s32.totalorder %s16, 4
      // Predicated region
      $region21: #{tpu_custom_call.1} parent=5 // pred_check
        %p311 = pneg %p310
      $region22: #{tpu_custom_call.1} parent=5 // pred_check_branch
        %313 = sbr.rel (%p311) target = $region24
      $region23: #{tpu_custom_call.1} parent=5 // pred_region
        // Predicated region
        $region25: #{tpu_custom_call.1} parent=23 // pred_check
          %p314 = pneg %p74
        $region26: #{tpu_custom_call.1} parent=23 // pred_check_branch
          %316 = sbr.rel (%p314) target = $region28
        $region27: #{tpu_custom_call.1} parent=23 // pred_region
          %p317 = scmp.lt.s32.totalorder %s24, 3
          %s318 = scalar_select %p317, %s24, 3
          %s319 = smul.addr %s318, 4
          %s320 = smul.addr %s319, 4
          %s321 = scalar_lea.vmem %s1, %s320
        $region28: #{tpu_custom_call.1} parent=23 // pred_fallthru
          _
        // Predicated region
        $region29: #{tpu_custom_call.1} parent=23 // pred_check
          %p322 = pneg %p100
        $region30: #{tpu_custom_call.1} parent=23 // pred_check_branch
          %324 = sbr.rel (%p322) target = $region32
        $region31: #{tpu_custom_call.1} parent=23 // pred_region
          %p325 = scmp.lt.s32.totalorder %s24, 3
          %s326 = scalar_select %p325, %s24, 3
          %s327 = smul.addr %s326, 4
          %s328 = smul.addr %s327, 4
          %s329 = scalar_lea.vmem %s2, %s328
        $region32: #{tpu_custom_call.1} parent=23 // pred_fallthru
          _
        // Predicated region
        $region33: #{tpu_custom_call.1} parent=23 // pred_check
          %p330 = pneg %p126
        $region34: #{tpu_custom_call.1} parent=23 // pred_check_branch
          %332 = sbr.rel (%p330) target = $region36
        $region35: #{tpu_custom_call.1} parent=23 // pred_region
          %p333 = scmp.lt.s32.totalorder %s24, 3
          %s334 = scalar_select %p333, %s24, 3
          %s335 = smul.addr %s334, 4
          %s336 = smul.addr %s335, 4
          %s337 = scalar_lea.vmem %s3, %s336
        $region36: #{tpu_custom_call.1} parent=23 // pred_fallthru
          _
        // Predicated region
        $region37: #{tpu_custom_call.1} parent=23 // pred_check
          %p338 = pneg %p152
        $region38: #{tpu_custom_call.1} parent=23 // pred_check_branch
          %340 = sbr.rel (%p338) target = $region40
        $region39: #{tpu_custom_call.1} parent=23 // pred_region
          %p341 = scmp.lt.s32.totalorder %s24, 3
          %s342 = scalar_select %p341, %s24, 3
          %s343 = scalar_lea.vmem %s4, %s342
        $region40: #{tpu_custom_call.1} parent=23 // pred_fallthru
          _
        // Predicated region
        $region41: #{tpu_custom_call.1} parent=23 // pred_check
          %p344 = pneg %p178
        $region42: #{tpu_custom_call.1} parent=23 // pred_check_branch
          %346 = sbr.rel (%p344) target = $region44
        $region43: #{tpu_custom_call.1} parent=23 // pred_region
          %p347 = scmp.lt.s32.totalorder %s24, 3
          %s348 = scalar_select %p347, %s24, 3
          %s349 = scalar_lea.vmem %s5, %s348
        $region44: #{tpu_custom_call.1} parent=23 // pred_fallthru
          _
        // Predicated region
        $region45: #{tpu_custom_call.1} parent=23 // pred_check
          %p350 = pneg %p204
        $region46: #{tpu_custom_call.1} parent=23 // pred_check_branch
          %352 = sbr.rel (%p350) target = $region48
        $region47: #{tpu_custom_call.1} parent=23 // pred_region
          %p353 = scmp.lt.s32.totalorder %s24, 3
          %s354 = scalar_select %p353, %s24, 3
          %s355 = scalar_lea.vmem %s6, %s354
        $region48: #{tpu_custom_call.1} parent=23 // pred_fallthru
          _
        // Predicated region
        $region49: #{tpu_custom_call.1} parent=23 // pred_check
          %p356 = pneg %p230
        $region50: #{tpu_custom_call.1} parent=23 // pred_check_branch
          %358 = sbr.rel (%p356) target = $region52
        $region51: #{tpu_custom_call.1} parent=23 // pred_region
          %p359 = scmp.lt.s32.totalorder %s24, 3
          %s360 = scalar_select %p359, %s24, 3
          %s361 = smul.addr %s360, 4
          %s362 = scalar_lea.vmem %s7, %s361
        $region52: #{tpu_custom_call.1} parent=23 // pred_fallthru
          _
      $region24: #{tpu_custom_call.1} parent=5 // pred_fallthru
        _
      %p363 = scmp.le.s32.totalorder 1, %s16
      %p364 = scmp.lt.s32.totalorder %s16, 5
      %p365 = pnand %p363, %p364
      %p366 = pneg %p365
      // Predicated region
      $region53: #{tpu_custom_call.1} parent=5 // pred_check
        _
      $region54: #{tpu_custom_call.1} parent=5 // pred_check_branch
        %368 = sbr.rel (%p365) target = $region56
      $region55: #{tpu_custom_call.1} parent=5 // pred_region
        %s369 = ssub.s32 %s16, 1
        %s370 = smul.u32 2, %s25
        %p371 = scmp.lt.s32.totalorder %s370, 1
        %s372 = scalar_select %p371, %s370, 1
        %s373 = smul.addr %s372, 4
        %s374 = scalar_lea.vmem %s0, %s373
        %p375 = pneg %p54
        %p376 = pneg %p51
        %p377 = scmp.lt.s32.totalorder %s26, 3
        %s378 = scalar_select %p377, %s26, 3
        %s379 = smul.addr %s378, 4
        %s380 = smul.addr %s379, 4
        %s381 = scalar_lea.vmem %s1, %s380
        %p382 = pneg %p80
        %p383 = pneg %p77
        %p384 = scmp.lt.s32.totalorder %s26, 3
        %s385 = scalar_select %p384, %s26, 3
        %s386 = smul.addr %s385, 4
        %s387 = smul.addr %s386, 4
        %s388 = scalar_lea.vmem %s2, %s387
        %p389 = pneg %p106
        %p390 = pneg %p103
        %p391 = scmp.lt.s32.totalorder %s26, 3
        %s392 = scalar_select %p391, %s26, 3
        %s393 = smul.addr %s392, 4
        %s394 = smul.addr %s393, 4
        %s395 = scalar_lea.vmem %s3, %s394
        %p396 = pneg %p132
        %p397 = pneg %p129
        %p398 = scmp.lt.s32.totalorder %s26, 3
        %s399 = scalar_select %p398, %s26, 3
        %s400 = scalar_lea.vmem %s4, %s399
        %p401 = pneg %p158
        %p402 = pneg %p155
        %p403 = scmp.lt.s32.totalorder %s26, 3
        %s404 = scalar_select %p403, %s26, 3
        %s405 = scalar_lea.vmem %s5, %s404
        %p406 = pneg %p184
        %p407 = pneg %p181
        %p408 = scmp.lt.s32.totalorder %s26, 3
        %s409 = scalar_select %p408, %s26, 3
        %s410 = scalar_lea.vmem %s6, %s409
        %p411 = pneg %p210
        %p412 = pneg %p207
        %p413 = scmp.lt.s32.totalorder %s26, 3
        %s414 = scalar_select %p413, %s26, 3
        %s415 = smul.addr %s414, 4
        %s416 = scalar_lea.vmem %s7, %s415
        %p417 = pneg %p236
        %p418 = pneg %p233
        %p419 = pneg %p257
        %p420 = pneg %p254
        %p421 = pneg %p283
        %p422 = pneg %p280
        %s423 = smul.u32 2, %s25
        %p424 = scmp.lt.s32.totalorder %s423, 1
        %s425 = scalar_select %p424, %s423, 1
        %s426 = smul.addr %s425, 4
        %s427 = scalar_lea.vmem %s0, %s426
        %s428 = smul.u32 2, %s25
        %p429 = scmp.lt.s32.totalorder %s26, 3
        %s430 = scalar_select %p429, %s26, 3
        %s431 = smul.addr %s430, 4
        %s432 = smul.addr %s431, 4
        %s433 = scalar_lea.vmem %s1, %s432
        %p434 = scmp.lt.s32.totalorder %s26, 3
        %s435 = scalar_select %p434, %s26, 3
        %s436 = smul.addr %s435, 4
        %s437 = smul.addr %s436, 4
        %s438 = scalar_lea.vmem %s2, %s437
        %p439 = scmp.lt.s32.totalorder %s26, 3
        %s440 = scalar_select %p439, %s26, 3
        %s441 = smul.addr %s440, 4
        %s442 = smul.addr %s441, 4
        %s443 = scalar_lea.vmem %s3, %s442
        %p444 = scmp.lt.s32.totalorder %s26, 3
        %s445 = scalar_select %p444, %s26, 3
        %s446 = scalar_lea.vmem %s4, %s445
        %p447 = scmp.lt.s32.totalorder %s26, 3
        %s448 = scalar_select %p447, %s26, 3
        %s449 = scalar_lea.vmem %s5, %s448
        %p450 = scmp.lt.s32.totalorder %s26, 3
        %s451 = scalar_select %p450, %s26, 3
        %s452 = scalar_lea.vmem %s6, %s451
        %p453 = scmp.lt.s32.totalorder %s26, 3
        %s454 = scalar_select %p453, %s26, 3
        %s455 = smul.addr %s454, 4
        %s456 = scalar_lea.vmem %s7, %s455
        %s457 = smul.u32 2, %s25
        %p459 = scmp.eq.s32.totalorder %s26, 0
        // Predicated region
        $region57: #{tpu_custom_call.1} parent=55 // pred_check
          %p460 = pneg %p459
        $region58: #{tpu_custom_call.1} parent=55 // pred_check_branch
          %462 = sbr.rel (%p460) target = $region60
        $region59: #{tpu_custom_call.1} parent=55 // pred_region
          %vm463 = vcmask 261120
          %464 = vst.msk [vmem:[#allocation2] sm:$0xff] %vm463, 0.0
          %465 = vst.msk [vmem:[#allocation2 + $0x8] sm:$0xff] %vm463, 0.0
        $region60: #{tpu_custom_call.1} parent=55 // pred_fallthru
          _
        %v466 = vld [vmem:[%s427] sm:$0xf]
        %v467 = vld [vmem:[%s427 + $0x4] sm:$0xf]
        %v468 = vld [vmem:[%s433] sm:$0xf]
        %v469 = vld [vmem:[%s433 + $0x4] sm:$0xf]
        %v470 = vld [vmem:[%s433 + $0x8] sm:$0xf]
        %v471 = vld [vmem:[%s433 + $0xc] sm:$0xf]
        %v472 = vld [vmem:[%s446] sm:$0x1]
        %v474 = vperm.slane %v472, 0
        %v478 = vunpack.c.l.b16 %v466
        %v479 = vunpack.c.l.b16 %v467
        %v480 = vpack.c.b16 %v479, %v478
        %v485 = vunpack.c.l.b16 %v468
        %v486 = vunpack.c.l.b16 %v469
        %v487 = vunpack.c.l.b16 %v470
        %v488 = vunpack.c.l.b16 %v471
        %v489 = vpack.c.b16 %v486, %v485
        %v490 = vpack.c.b16 %v488, %v487
        %vm493 = vcmask 261120
        %v495 = vsel %vm493, %v480, 0
        %497 = vmatpush.bf16.msra.mxu0 0
        %498 = vmatpush.bf16.msra.mxu0 0
        %499 = vmatpush.bf16.msra.mxu0 0
        %500 = vmatpush.bf16.msra.mxu0 0
        %501 = vmatpush.bf16.msra.mxu0 0
        %502 = vmatpush.bf16.msra.mxu0 0
        %503 = vmatpush.bf16.msra.mxu0 %v490
        %504 = vmatpush.bf16.msra.mxu0 %v489
        %505 = vmatmul.bf16.gmra.mxu0 %v495
        %v506 = vpop.f32.mrf.mxu0
        %v507 = vadd.f32 %v474, %v506
        %v508 = vpop.f32.mrf.mxu0
        %v509 = vadd.f32 %v474, %v508
        %510 = vdwg.mxu0
        %v511 = vld [vmem:[%s438] sm:$0xf]
        %v512 = vld [vmem:[%s438 + $0x4] sm:$0xf]
        %v513 = vld [vmem:[%s438 + $0x8] sm:$0xf]
        %v514 = vld [vmem:[%s438 + $0xc] sm:$0xf]
        %v515 = vld [vmem:[%s449] sm:$0x1]
        %v517 = vperm.slane %v515, 0
        %v523 = vunpack.c.l.b16 %v511
        %v524 = vunpack.c.l.b16 %v512
        %v525 = vunpack.c.l.b16 %v513
        %v526 = vunpack.c.l.b16 %v514
        %v527 = vpack.c.b16 %v524, %v523
        %v528 = vpack.c.b16 %v526, %v525
        %531 = vmatpush.bf16.msra.mxu0 0
        %532 = vmatpush.bf16.msra.mxu0 0
        %533 = vmatpush.bf16.msra.mxu0 0
        %534 = vmatpush.bf16.msra.mxu0 0
        %535 = vmatpush.bf16.msra.mxu0 0
        %536 = vmatpush.bf16.msra.mxu0 0
        %537 = vmatpush.bf16.msra.mxu0 %v528
        %538 = vmatpush.bf16.msra.mxu0 %v527
        %539 = vmatmul.bf16.gmra.mxu0 %v495
        %v540 = vpop.f32.mrf.mxu0
        %v541 = vadd.f32 %v517, %v540
        %v542 = vpop.f32.mrf.mxu0
        %v543 = vadd.f32 %v517, %v542
        %544 = vdwg.mxu0
        %v545 = vld [vmem:[%s443] sm:$0xf]
        %v546 = vld [vmem:[%s443 + $0x4] sm:$0xf]
        %v547 = vld [vmem:[%s443 + $0x8] sm:$0xf]
        %v548 = vld [vmem:[%s443 + $0xc] sm:$0xf]
        %v549 = vld [vmem:[%s452] sm:$0x1]
        %v551 = vperm.slane %v549, 0
        %v557 = vunpack.c.l.b16 %v545
        %v558 = vunpack.c.l.b16 %v546
        %v559 = vunpack.c.l.b16 %v547
        %v560 = vunpack.c.l.b16 %v548
        %v561 = vpack.c.b16 %v558, %v557
        %v562 = vpack.c.b16 %v560, %v559
        %565 = vmatpush.bf16.msra.mxu0 0
        %566 = vmatpush.bf16.msra.mxu0 0
        %567 = vmatpush.bf16.msra.mxu0 0
        %568 = vmatpush.bf16.msra.mxu0 0
        %569 = vmatpush.bf16.msra.mxu0 0
        %570 = vmatpush.bf16.msra.mxu0 0
        %571 = vmatpush.bf16.msra.mxu0 %v562
        %572 = vmatpush.bf16.msra.mxu0 %v561
        %573 = vmatmul.bf16.gmra.mxu0 %v495
        %v574 = vpop.f32.mrf.mxu0
        %v575 = vadd.f32 %v551, %v574
        %v576 = vpop.f32.mrf.mxu0
        %v577 = vadd.f32 %v551, %v576
        %578 = vdwg.mxu0
        %v579 = vpack.c.bf16 %v507, %v507
        %v580 = vpack.c.bf16 %v509, %v509
        %v581 = vpack.c.bf16 %v541, %v541
        %v582 = vpack.c.bf16 %v543, %v543
        %v583 = vpack.c.bf16 %v575, %v575
        %v584 = vpack.c.bf16 %v577, %v577
        %vm585 = vcmask 64512
        %v587 = vsel %vm585, %v579, 0
        %v590 = vsel %vm585, %v581, 0
        %592 = vmatpush.bf16.xpose.msra.mxu0 0
        %593 = vmatpush.bf16.xpose.msra.mxu0 0
        %594 = vmatpush.bf16.xpose.msra.mxu0 0
        %595 = vmatpush.bf16.xpose.msra.mxu0 0
        %596 = vmatpush.bf16.xpose.msra.mxu0 0
        %597 = vmatpush.bf16.xpose.msra.mxu0 0
        %598 = vmatpush.bf16.xpose.msra.mxu0 0
        %599 = vmatpush.bf16.xpose.msra.mxu0 %v590
        %600 = vmatmul.bf16.gmra.mxu0 %v587
        %v601 = vpop.f32.mrf.mxu0
        %v602 = vadd.f32 0.0, %v601
        %v603 = vpop.f32.mrf.mxu0
        %604 = vdwg.mxu0
        %v606 = vsel %vm585, %v580, 0
        %v609 = vsel %vm585, %v582, 0
        %611 = vmatpush.bf16.xpose.msra.mxu0 0
        %612 = vmatpush.bf16.xpose.msra.mxu0 0
        %613 = vmatpush.bf16.xpose.msra.mxu0 0
        %614 = vmatpush.bf16.xpose.msra.mxu0 0
        %615 = vmatpush.bf16.xpose.msra.mxu0 0
        %616 = vmatpush.bf16.xpose.msra.mxu0 0
        %617 = vmatpush.bf16.xpose.msra.mxu0 0
        %618 = vmatpush.bf16.xpose.msra.mxu0 %v609
        %619 = vmatmul.bf16.gmra.mxu0 %v606
        %v620 = vpop.f32.mrf.mxu0
        %v621 = vadd.f32 0.0, %v620
        %v622 = vpop.f32.mrf.mxu0
        %623 = vdwg.mxu0
        %v624 = vsel %vm585, %v602, -inf
        %625 = vmax.xlane.f32.xlu0 %v624
        %v626 = vpop.xlane.xlu0 %625
        %v627 = vsel %vm585, %v621, -inf
        %628 = vmax.xlane.f32.xlu0 %v627
        %v629 = vpop.xlane.xlu0 %628
        %v630 = vsub.f32 %v602, %v626
        %v631 = vsub.f32 %v621, %v629
        %v632 = vmul.f32 %v630, 1.442695
        %v633 = vpow.pop %v632
        %v634 = vmul.f32 %v631, 1.442695
        %v635 = vpow.pop %v634
        %v636 = vsel %vm585, %v633, 0.0
        %637 = vadd.xlane.f32.xlu0 %v636
        %v638 = vpop.xlane.xlu0 %637
        %v639 = vsel %vm585, %v635, 0.0
        %640 = vadd.xlane.f32.xlu0 %v639
        %v641 = vpop.xlane.xlu0 %640
        %v642 = vpack.c.bf16 %v633, %v633
        %v643 = vpack.c.bf16 %v635, %v635
        %v645 = vsel %vm585, %v642, 0
        %vm647 = vcmask 1043456
        %v649 = vsel %vm647, %v583, 0
        %651 = vmatpush.bf16.msra.mxu0 0
        %652 = vmatpush.bf16.msra.mxu0 0
        %653 = vmatpush.bf16.msra.mxu0 0
        %654 = vmatpush.bf16.msra.mxu0 0
        %655 = vmatpush.bf16.msra.mxu0 0
        %656 = vmatpush.bf16.msra.mxu0 0
        %657 = vmatpush.bf16.msra.mxu0 0
        %658 = vmatpush.bf16.msra.mxu0 %v649
        %659 = vmatmul.bf16.gmra.mxu0 %v645
        %v660 = vpop.f32.mrf.mxu0
        %v661 = vadd.f32 0.0, %v660
        %v662 = vpop.f32.mrf.mxu0
        %663 = vdwg.mxu0
        %v665 = vsel %vm585, %v643, 0
        %v668 = vsel %vm647, %v584, 0
        %670 = vmatpush.bf16.msra.mxu0 0
        %671 = vmatpush.bf16.msra.mxu0 0
        %672 = vmatpush.bf16.msra.mxu0 0
        %673 = vmatpush.bf16.msra.mxu0 0
        %674 = vmatpush.bf16.msra.mxu0 0
        %675 = vmatpush.bf16.msra.mxu0 0
        %676 = vmatpush.bf16.msra.mxu0 0
        %677 = vmatpush.bf16.msra.mxu0 %v668
        %678 = vmatmul.bf16.gmra.mxu0 %v665
        %v679 = vpop.f32.mrf.mxu0
        %v680 = vadd.f32 0.0, %v679
        %v681 = vpop.f32.mrf.mxu0
        %682 = vdwg.mxu0
        %v683 = vrcp.pop %v638
        %v684 = vrcp.pop %v641
        %v685 = vmul.f32 %v661, %v683
        %v686 = vmul.f32 %v680, %v684
        %v687 = vpack.c.bf16 %v686, %v685
        %v688 = vld [vmem:[#allocation2] sm:$0xff]
        %v689 = vld [vmem:[#allocation2 + $0x8] sm:$0xff]
        %v690 = vld [vmem:[%s456] sm:$0xf]
        %v692 = vsel %vm585, %v687, 0
        %v695 = vsel %vm647, %v690, 0
        %697 = vmatpush.bf16.msra.mxu0 0
        %698 = vmatpush.bf16.msra.mxu0 0
        %699 = vmatpush.bf16.msra.mxu0 0
        %700 = vmatpush.bf16.msra.mxu0 0
        %701 = vmatpush.bf16.msra.mxu0 0
        %702 = vmatpush.bf16.msra.mxu0 0
        %703 = vmatpush.bf16.msra.mxu0 0
        %704 = vmatpush.bf16.msra.mxu0 %v695
        %705 = vmatmul.bf16.gmra.mxu0 %v692
        %v706 = vpop.f32.mrf.mxu0
        %v707 = vadd.f32 0.0, %v706
        %v708 = vpop.f32.mrf.mxu0
        %v709 = vadd.f32 0.0, %v708
        %710 = vdwg.mxu0
        %v711 = vadd.f32 %v688, %v707
        %v712 = vadd.f32 %v689, %v709
        %713 = vst.msk [vmem:[#allocation2] sm:$0xff] %vm493, %v711
        %714 = vst.msk [vmem:[#allocation2 + $0x8] sm:$0xff] %vm493, %v712
        %p715 = scmp.eq.s32.totalorder %s26, 3
        // Predicated region
        $region61: #{tpu_custom_call.1} parent=55 // pred_check
          %p716 = pneg %p715
        $region62: #{tpu_custom_call.1} parent=55 // pred_check_branch
          %718 = sbr.rel (%p716) target = $region64
        $region63: #{tpu_custom_call.1} parent=55 // pred_region
          %v719 = vld [vmem:[#allocation2] sm:$0xff]
          %v720 = vld [vmem:[#allocation2 + $0x8] sm:$0xff]
          %v721 = vld [vmem:[%s8] sm:$0x1]
          %v723 = vperm.slane %v721, 0
          %v725 = vadd.f32 %v719, %v723
          %v726 = vadd.f32 %v720, %v723
          %727 = vst.msk [vmem:[#allocation3] sm:$0xff] %vm493, %v725
          %728 = vst.msk [vmem:[#allocation3 + $0x8] sm:$0xff] %vm493, %v726
        $region64: #{tpu_custom_call.1} parent=55 // pred_fallthru
          _
        // Predicated region
        $region65: #{tpu_custom_call.1} parent=55 // pred_check
          %p729 = pneg %p280
        $region66: #{tpu_custom_call.1} parent=55 // pred_check_branch
          %731 = sbr.rel (%p729) target = $region68
        $region67: #{tpu_custom_call.1} parent=55 // pred_region
          %s732 = smul.u32 2, %s25
          %734 = vsyncadd [#allocation4], 0
          %s735 = smul.addr %s732, 8
          %s736 = scalar_lea.hbm %s9, %s735
          %s737 = sshll.u32 [#allocation3], 4
          %s738 = int_to_ptr.vmem [resolvable:$true] %s737
          %s739 = sshll.u32 %s736, 4
          %s740 = int_to_ptr.hbm [resolvable:$true] %s739
          %745 = dma.vmem_to_hbm [thread:$0]  %s738, 256, %s740, [#allocation4], 128, 128, 8
        $region68: #{tpu_custom_call.1} parent=55 // pred_fallthru
          _
        // Predicated region
        $region69: #{tpu_custom_call.1} parent=55 // pred_check
          %p746 = pneg %p280
        $region70: #{tpu_custom_call.1} parent=55 // pred_check_branch
          %748 = sbr.rel (%p746) target = $region72
        $region71: #{tpu_custom_call.1} parent=55 // pred_region
          %750 = dma.done [#allocation4], 256
        $region72: #{tpu_custom_call.1} parent=55 // pred_fallthru
          _
      $region56: #{tpu_custom_call.1} parent=5 // pred_fallthru
        _
      %p751 = scmp.le.s32.totalorder 2, %s16
      // Predicated region
      $region73: #{tpu_custom_call.1} parent=5 // pred_check
        %p752 = pneg %p751
      $region74: #{tpu_custom_call.1} parent=5 // pred_check_branch
        %754 = sbr.rel (%p752) target = $region76
      $region75: #{tpu_custom_call.1} parent=5 // pred_region
        %s755 = ssub.s32 %s16, 2
      $region76: #{tpu_custom_call.1} parent=5 // pred_fallthru
        _
    $region6: #{tpu_custom_call.1} parent=1 // loop_footer
      %s20 = sadd.s32 1, %s16
    $region7: #{tpu_custom_call.1} parent=1 // loop_footer_branch
      %15 = sbr.rel target = $region3
    $region8: #{tpu_custom_call.1} parent=1 // loop_exit
      _
    %756 = vsyncpa [#allocation4], 1
    %s757 = scalar_lea.sflag [#allocation4], 1
    %758 = vsyncpa %s757, 1

</llo_original>
